<compile_context>
chip_gen: v6e
topology: v6e:2x2x1
jax: 0.10.0
libtpu: 0.0.40
codegen_flags: <defaults>
</compile_context>

<pallas_src>
import functools

import jax
import jax.numpy as jnp
from jax import lax
from jax.experimental import pallas as pl
from jax.experimental.pallas import tpu as pltpu


def _local_aggregator_kernel(h_q_ref, h_kv_ref, adj_ref, a_ref, o_ref, *,
                             negative_slope):
    # h_q_ref:  (1, TN, D)  query-row tile of hidden
    # h_kv_ref: (1, N,  D)  full hidden for this batch element (keys/values)
    # adj_ref:  (1, TN, N)  int32 adjacency-type rows for the query tile
    # a_ref:    (4, D)      attention vectors a_0..a_3 (rows)
    # o_ref:    (1, TN, D)  output tile
    h_q = h_q_ref[0].astype(jnp.float32)      # (TN, D)
    h_kv = h_kv_ref[0].astype(jnp.float32)    # (N, D)
    adj = adj_ref[0]                          # (TN, N) int32
    a = a_ref[...].astype(jnp.float32)        # (4, D)

    c1 = (1.0 + negative_slope) * 0.5
    c2 = (1.0 - negative_slope) * 0.5

    # Exact LeakyReLU factorization: leaky(x*y) = c1*(x*y) + c2*(|x|*|y|).
    q_cat = jnp.concatenate([h_q, jnp.abs(h_q)], axis=-1)        # (TN, 2D)
    k_cat = jnp.concatenate([h_kv, jnp.abs(h_kv)], axis=-1)      # (N, 2D)
    a_cat = jnp.concatenate([c1 * a, c2 * a], axis=-1)           # (4, 2D)
    k_cat_bf = k_cat.astype(jnp.bfloat16)

    def e_for(k):
        # Scale the (small) query tile by the k-th attention vector, then one
        # MXU matmul: (TN, 2D) · (N, 2D)^T -> (TN, N), f32 accumulation.
        lhs = (q_cat * a_cat[k:k + 1, :]).astype(jnp.bfloat16)   # (TN, 2D)
        return lax.dot_general(
            lhs, k_cat_bf,
            dimension_numbers=(((1,), (1,)), ((), ())),
            preferred_element_type=jnp.float32)

    e0 = e_for(0)
    e1 = e_for(1)
    e2 = e_for(2)
    e3 = e_for(3)

    neg = jnp.float32(-9e15)
    alpha = jnp.where(adj == 1, e0, neg)
    alpha = jnp.where(adj == 2, e1, alpha)
    alpha = jnp.where(adj == 3, e2, alpha)
    alpha = jnp.where(adj == 4, e3, alpha)

    # Softmax with the normalization folded after the aggregation matmul:
    #   out = (exp(alpha - m) @ h) * 1/rowsum(exp(alpha - m))
    m = jnp.max(alpha, axis=-1, keepdims=True)                   # (TN, 1)
    p = jnp.exp(alpha - m)                                       # (TN, N) f32
    denom = jnp.sum(p, axis=-1, keepdims=True)                   # (TN, 1)
    unnorm = jnp.dot(p.astype(jnp.bfloat16),
                     h_kv.astype(jnp.bfloat16),
                     preferred_element_type=jnp.float32)         # (TN, D)
    out = unnorm * pl.reciprocal(denom, approx=True)
    o_ref[0] = out.astype(o_ref.dtype)


def local_aggregator(hidden, adj, a_params, negative_slope, *, max_tile_n=128):
    """hidden: (B, N, D) f32, adj: (B, N, N) i32, a_params: (4, D) f32."""
    B, N, D = hidden.shape
    # Query-row tile: full N when small, else 128 (multiple of 8 as required).
    tn = N if N <= max_tile_n else max_tile_n
    grid = (B, pl.cdiv(N, tn))

    # Advisory cost estimate: 4 e-matmuls with 2D contraction + final p @ h.
    flops = 18 * B * N * N * D
    transcendentals = B * N * N + B * N          # exp + approx reciprocal
    bytes_accessed = (2 * hidden.size * hidden.dtype.itemsize   # q + kv streams
                      + adj.size * adj.dtype.itemsize
                      + a_params.size * a_params.dtype.itemsize
                      + hidden.size * hidden.dtype.itemsize)    # output

    kernel = functools.partial(_local_aggregator_kernel,
                               negative_slope=float(negative_slope))
    return pl.pallas_call(
        kernel,
        out_shape=jax.ShapeDtypeStruct((B, N, D), hidden.dtype),
        grid=grid,
        in_specs=[
            pl.BlockSpec((1, tn, D), lambda b, q: (b, q, 0)),    # query tile
            pl.BlockSpec((1, N, D), lambda b, q: (b, 0, 0)),     # full keys/vals
            pl.BlockSpec((1, tn, N), lambda b, q: (b, q, 0)),    # adjacency rows
            pl.BlockSpec((4, D), lambda b, q: (0, 0)),           # a_0..a_3
        ],
        out_specs=pl.BlockSpec((1, tn, D), lambda b, q: (b, q, 0)),
        compiler_params=pltpu.CompilerParams(
            dimension_semantics=("parallel", "parallel"),
            vmem_limit_bytes=48 * 1024 * 1024,   # sized for v7x's 64 MiB VMEM
        ),
        cost_estimate=pl.CostEstimate(
            flops=int(flops),
            transcendentals=int(transcendentals),
            bytes_accessed=int(bytes_accessed),
        ),
    )(hidden, hidden, adj, a_params)


def _reference(hidden, adj, a_params, negative_slope):
    """Pure-JAX reference mirroring the PyTorch forward exactly (f32)."""
    h = hidden.astype(jnp.float32)
    prod = h[:, :, None, :] * h[:, None, :, :]               # (B,N,N,D)
    act = jnp.where(prod >= 0.0, prod, negative_slope * prod)
    e = jnp.einsum("bijd,kd->kbij", act, a_params)            # (4,B,N,N)
    neg = jnp.full(e[0].shape, -9e15, dtype=jnp.float32)
    alpha = jnp.where(adj == 1, e[0], neg)
    alpha = jnp.where(adj == 2, e[1], alpha)
    alpha = jnp.where(adj == 3, e[2], alpha)
    alpha = jnp.where(adj == 4, e[3], alpha)
    alpha = jax.nn.softmax(alpha, axis=-1)
    return jnp.einsum("bij,bjd->bid", alpha, h)


if __name__ == "__main__":
    # Small, deterministic example shapes: batch=2, num_nodes(N)=8, dim=32.
    B, N, D = 2, 8, 32
    negative_slope = 0.2  # LeakyReLU alpha

    key = jax.random.PRNGKey(0)
    k_h, k_adj, k_a = jax.random.split(key, 3)

    hidden = jax.random.normal(k_h, (B, N, D), dtype=jnp.float32)
    adj = jax.random.randint(k_adj, (B, N, N), minval=0, maxval=5,
                             dtype=jnp.int32)
    # a_0..a_3 each (dim, 1) in the torch module; stacked here as rows of
    # a (4, dim) matrix.  (bias / dropout are unused in forward.)
    a_params = (jax.random.normal(k_a, (4, D), dtype=jnp.float32)
                * (1.0 / jnp.sqrt(D)))

    out = local_aggregator(hidden, adj, a_params, negative_slope)
    out = jax.block_until_ready(out)

    ref = _reference(hidden, adj, a_params, negative_slope)
    assert out.shape == (B, N, D)
    # bf16 MXU operands with f32 accumulation -> tolerance relaxed vs the
    # pure-f32 reference.
    max_diff = float(jnp.max(jnp.abs(out - ref)))
    assert jnp.allclose(out, ref, rtol=3e-2, atol=3e-2), (
        f"Pallas output mismatch vs reference (max abs diff={max_diff})"
    )
    print("KERNEL_OK")
</pallas_src>

<mosaic_0001>
module attributes {stable_mosaic.version = 11 : i64} {
  func.func @_local_aggregator_kernel(%arg0: i32, %arg1: i32, %arg2: memref<1x8x32xf32, #tpu.memory_space<vmem>>, %arg3: memref<1x8x32xf32, #tpu.memory_space<vmem>>, %arg4: memref<1x8x8xi32, #tpu.memory_space<vmem>>, %arg5: memref<4x32xf32, #tpu.memory_space<vmem>>, %arg6: memref<1x8x32xf32, #tpu.memory_space<vmem>>) attributes {dimension_semantics = [#tpu.dimension_semantics<parallel>, #tpu.dimension_semantics<parallel>], iteration_bounds = array<i64: 2, 1>, scalar_prefetch = 0 : i64, scratch_operands = 0 : i64, tpu.core_type = #tpu.core_type<tc>, window_params = [{transform_indices = @transform_0, window_bounds = array<i64: 1, 8, 32>}, {transform_indices = @transform_1, window_bounds = array<i64: 1, 8, 32>}, {transform_indices = @transform_2, window_bounds = array<i64: 1, 8, 8>}, {pipeline_mode = #tpu.pipeline_mode<synchronous>, transform_indices = @transform_3, window_bounds = array<i64: 4, 32>}, {transform_indices = @transform_4, window_bounds = array<i64: 1, 8, 32>}]} {
    %c0 = arith.constant 0 : index
    %c0_0 = arith.constant 0 : index
    %c0_1 = arith.constant 0 : index
    %0 = vector.load %arg2[%c0, %c0_0, %c0_1] : memref<1x8x32xf32, #tpu.memory_space<vmem>>, vector<1x8x32xf32>
    %1 = vector.shape_cast %0 : vector<1x8x32xf32> to vector<8x32xf32>
    %c0_2 = arith.constant 0 : index
    %c0_3 = arith.constant 0 : index
    %c0_4 = arith.constant 0 : index
    %2 = vector.load %arg3[%c0_2, %c0_3, %c0_4] : memref<1x8x32xf32, #tpu.memory_space<vmem>>, vector<1x8x32xf32>
    %3 = vector.shape_cast %2 : vector<1x8x32xf32> to vector<8x32xf32>
    %c0_5 = arith.constant 0 : index
    %c0_6 = arith.constant 0 : index
    %c0_7 = arith.constant 0 : index
    %4 = vector.load %arg4[%c0_5, %c0_6, %c0_7] : memref<1x8x8xi32, #tpu.memory_space<vmem>>, vector<1x8x8xi32>
    %5 = vector.shape_cast %4 : vector<1x8x8xi32> to vector<8x8xi32>
    %c0_8 = arith.constant 0 : index
    %c0_9 = arith.constant 0 : index
    %6 = vector.load %arg5[%c0_8, %c0_9] : memref<4x32xf32, #tpu.memory_space<vmem>>, vector<4x32xf32>
    %7 = math.absf %1 : vector<8x32xf32>
    %8 = tpu.concatenate %1, %7 in 1 : vector<8x32xf32>, vector<8x32xf32> -> vector<8x64xf32>
    %9 = math.absf %3 : vector<8x32xf32>
    %10 = tpu.concatenate %3, %9 in 1 : vector<8x32xf32>, vector<8x32xf32> -> vector<8x64xf32>
    %cst = arith.constant 6.000000e-01 : f32
    %11 = vector.broadcast %cst : f32 to vector<4x32xf32>
    %12 = arith.mulf %11, %6 : vector<4x32xf32>
    %cst_10 = arith.constant 4.000000e-01 : f32
    %13 = vector.broadcast %cst_10 : f32 to vector<4x32xf32>
    %14 = arith.mulf %13, %6 : vector<4x32xf32>
    %15 = tpu.concatenate %12, %14 in 1 : vector<4x32xf32>, vector<4x32xf32> -> vector<4x64xf32>
    %16 = arith.truncf %10 : vector<8x64xf32> to vector<8x64xbf16>
    %17 = vector.extract_strided_slice %15 {offsets = [0, 0], sizes = [1, 64], strides = [1, 1]} : vector<4x64xf32> to vector<1x64xf32>
    %18 = vector.broadcast %17 : vector<1x64xf32> to vector<8x64xf32>
    %19 = arith.mulf %8, %18 : vector<8x64xf32>
    %20 = arith.truncf %19 : vector<8x64xf32> to vector<8x64xbf16>
    %cst_11 = arith.constant dense<0.000000e+00> : vector<8x8xf32>
    %21 = tpu.matmul %20, %16, %cst_11 {dimension_numbers = #tpu.dot_dimension_numbers<[1], [1], [0], [0], [0, 0, 1, 0], [], []>} : vector<8x64xbf16>, vector<8x64xbf16>, vector<8x8xf32> -> vector<8x8xf32>
    %22 = vector.extract_strided_slice %15 {offsets = [1, 0], sizes = [1, 64], strides = [1, 1]} : vector<4x64xf32> to vector<1x64xf32>
    %23 = vector.broadcast %22 : vector<1x64xf32> to vector<8x64xf32>
    %24 = arith.mulf %8, %23 : vector<8x64xf32>
    %25 = arith.truncf %24 : vector<8x64xf32> to vector<8x64xbf16>
    %cst_12 = arith.constant dense<0.000000e+00> : vector<8x8xf32>
    %26 = tpu.matmul %25, %16, %cst_12 {dimension_numbers = #tpu.dot_dimension_numbers<[1], [1], [0], [0], [0, 0, 1, 0], [], []>} : vector<8x64xbf16>, vector<8x64xbf16>, vector<8x8xf32> -> vector<8x8xf32>
    %27 = vector.extract_strided_slice %15 {offsets = [2, 0], sizes = [1, 64], strides = [1, 1]} : vector<4x64xf32> to vector<1x64xf32>
    %28 = vector.broadcast %27 : vector<1x64xf32> to vector<8x64xf32>
    %29 = arith.mulf %8, %28 : vector<8x64xf32>
    %30 = arith.truncf %29 : vector<8x64xf32> to vector<8x64xbf16>
    %cst_13 = arith.constant dense<0.000000e+00> : vector<8x8xf32>
    %31 = tpu.matmul %30, %16, %cst_13 {dimension_numbers = #tpu.dot_dimension_numbers<[1], [1], [0], [0], [0, 0, 1, 0], [], []>} : vector<8x64xbf16>, vector<8x64xbf16>, vector<8x8xf32> -> vector<8x8xf32>
    %32 = vector.extract_strided_slice %15 {offsets = [3, 0], sizes = [1, 64], strides = [1, 1]} : vector<4x64xf32> to vector<1x64xf32>
    %33 = vector.broadcast %32 : vector<1x64xf32> to vector<8x64xf32>
    %34 = arith.mulf %8, %33 : vector<8x64xf32>
    %35 = arith.truncf %34 : vector<8x64xf32> to vector<8x64xbf16>
    %cst_14 = arith.constant dense<0.000000e+00> : vector<8x8xf32>
    %36 = tpu.matmul %35, %16, %cst_14 {dimension_numbers = #tpu.dot_dimension_numbers<[1], [1], [0], [0], [0, 0, 1, 0], [], []>} : vector<8x64xbf16>, vector<8x64xbf16>, vector<8x8xf32> -> vector<8x8xf32>
    %c1_i32 = arith.constant 1 : i32
    %37 = vector.broadcast %c1_i32 : i32 to vector<8x8xi32>
    %38 = arith.cmpi eq, %5, %37 : vector<8x8xi32>
    %cst_15 = arith.constant -9.000000e+15 : f32
    %39 = vector.broadcast %cst_15 : f32 to vector<8x8xf32>
    %40 = arith.select %38, %21, %39 : vector<8x8xi1>, vector<8x8xf32>
    %c2_i32 = arith.constant 2 : i32
    %41 = vector.broadcast %c2_i32 : i32 to vector<8x8xi32>
    %42 = arith.cmpi eq, %5, %41 : vector<8x8xi32>
    %43 = arith.select %42, %26, %40 : vector<8x8xi1>, vector<8x8xf32>
    %c3_i32 = arith.constant 3 : i32
    %44 = vector.broadcast %c3_i32 : i32 to vector<8x8xi32>
    %45 = arith.cmpi eq, %5, %44 : vector<8x8xi32>
    %46 = arith.select %45, %31, %43 : vector<8x8xi1>, vector<8x8xf32>
    %c4_i32 = arith.constant 4 : i32
    %47 = vector.broadcast %c4_i32 : i32 to vector<8x8xi32>
    %48 = arith.cmpi eq, %5, %47 : vector<8x8xi32>
    %49 = arith.select %48, %36, %46 : vector<8x8xi1>, vector<8x8xf32>
    %cst_16 = arith.constant dense<0xFF800000> : vector<8xf32>
    %50 = vector.multi_reduction <maximumf>, %49, %cst_16 [1] : vector<8x8xf32> to vector<8xf32>
    %51 = vector.shape_cast %50 : vector<8xf32> to vector<8x1xf32>
    %52 = vector.broadcast %51 : vector<8x1xf32> to vector<8x8xf32>
    %53 = arith.subf %49, %52 : vector<8x8xf32>
    %54 = math.exp %53 : vector<8x8xf32>
    %cst_17 = arith.constant dense<0.000000e+00> : vector<8xf32>
    %55 = vector.multi_reduction <add>, %54, %cst_17 [1] : vector<8x8xf32> to vector<8xf32>
    %56 = vector.shape_cast %55 : vector<8xf32> to vector<8x1xf32>
    %57 = arith.truncf %54 : vector<8x8xf32> to vector<8x8xbf16>
    %58 = arith.truncf %3 : vector<8x32xf32> to vector<8x32xbf16>
    %cst_18 = arith.constant dense<0.000000e+00> : vector<8x32xf32>
    %59 = tpu.matmul %57, %58, %cst_18 {dimension_numbers = #tpu.dot_dimension_numbers<[1], [0], [0], [1], [0, 0, 1, 1], [], []>} : vector<8x8xbf16>, vector<8x32xbf16>, vector<8x32xf32> -> vector<8x32xf32>
    %60 = tpu.reciprocal %56 {approx = true} : vector<8x1xf32> -> vector<8x1xf32>
    %61 = vector.broadcast %60 : vector<8x1xf32> to vector<8x32xf32>
    %62 = arith.mulf %59, %61 : vector<8x32xf32>
    %c0_19 = arith.constant 0 : index
    %c0_20 = arith.constant 0 : index
    %c0_21 = arith.constant 0 : index
    %63 = vector.load %arg6[%c0_19, %c0_20, %c0_21] : memref<1x8x32xf32, #tpu.memory_space<vmem>>, vector<1x8x32xf32>
    %64 = vector.shape_cast %63 : vector<1x8x32xf32> to vector<8x32xf32>
    %65 = vector.shape_cast %62 : vector<8x32xf32> to vector<1x8x32xf32>
    tpu.vector_store %arg6[%c0_19, %c0_20, %c0_21], %65 {strides = array<i32>} : memref<1x8x32xf32, #tpu.memory_space<vmem>>, vector<1x8x32xf32>,
    return
  }
  func.func @transform_0(%arg0: i32, %arg1: i32) -> (i32, i32, i32) {
    %c0_i32 = arith.constant 0 : i32
    %c0_i32_0 = arith.constant 0 : i32
    return %arg0, %arg1, %c0_i32 : i32, i32, i32
  }
  func.func @transform_1(%arg0: i32, %arg1: i32) -> (i32, i32, i32) {
    %c0_i32 = arith.constant 0 : i32
    %c0_i32_0 = arith.constant 0 : i32
    %c0_i32_1 = arith.constant 0 : i32
    return %arg0, %c0_i32, %c0_i32_0 : i32, i32, i32
  }
  func.func @transform_2(%arg0: i32, %arg1: i32) -> (i32, i32, i32) {
    %c0_i32 = arith.constant 0 : i32
    %c0_i32_0 = arith.constant 0 : i32
    return %arg0, %arg1, %c0_i32 : i32, i32, i32
  }
  func.func @transform_3(%arg0: i32, %arg1: i32) -> (i32, i32) {
    %c0_i32 = arith.constant 0 : i32
    %c0_i32_0 = arith.constant 0 : i32
    %c0_i32_1 = arith.constant 0 : i32
    return %c0_i32, %c0_i32_0 : i32, i32
  }
  func.func @transform_4(%arg0: i32, %arg1: i32) -> (i32, i32, i32) {
    %c0_i32 = arith.constant 0 : i32
    %c0_i32_0 = arith.constant 0 : i32
    return %arg0, %arg1, %c0_i32 : i32, i32, i32
  }
}

</mosaic_0001>

<llo_original>
// kernel: tpu_custom_call.1
$region0: #{tpu_custom_call.1}
  #allocation0 [shape = 'u32[]', space=smem, size = 0x4, offset = 0x4, fixed_abs, tag = 'smem constant byte address 0x4 - core index']
  #allocation1 [shape = 'u32[144,128]{1,0:T(1,128)}', space=vmem, size = 0x12000, scoped, tag = 'internal scratch']
  %s0 = inlined_call_operand.hbm [shape: f32[2,8,32], index: 0, kind: input, shape index: {}]
  %s1 = inlined_call_operand.hbm [shape: f32[2,8,32], index: 1, kind: input, shape index: {}]
  %s2 = inlined_call_operand.hbm [shape: s32[2,8,8], index: 2, kind: input, shape index: {}]
  %s3 = inlined_call_operand.vmem [shape: f32[4,32], index: 3, kind: input, shape index: {}]
  %s4 = inlined_call_operand.hbm [shape: f32[2,8,32], index: 4, kind: output, shape index: {}]
  %s5 = sld [smem:[#allocation0]]
  $region61: #{tpu_custom_call.1} parent=0
    _
  %s7 = ssub.s32 1, %s5
  %s8 = scalar_select 0, %s7, %s5
  $region1: #{tpu_custom_call.1} parent=0
    #allocation2 [shape = 'u8[8192]{0}', space=vmem, size = 0x2000, scoped, tag = 'input window, operand 0']
    #allocation3 [shape = 's32[2]{0}', space=sflag, size = 0x8, scoped, tag = 'scoped memory for tpu_custom_call.1']
    #allocation4 [shape = 's32[2]{0}', space=sflag, size = 0x8, scoped, tag = 'scoped memory for tpu_custom_call.1']
    #allocation5 [shape = 'u8[8192]{0}', space=vmem, size = 0x2000, scoped, tag = 'input window, operand 1']
    #allocation6 [shape = 's32[2]{0}', space=sflag, size = 0x8, scoped, tag = 'scoped memory for tpu_custom_call.1']
    #allocation7 [shape = 'u8[8192]{0}', space=vmem, size = 0x2000, scoped, tag = 'input window, operand 2']
    #allocation8 [shape = 'u8[8192]{0}', space=vmem, size = 0x2000, scoped, tag = 'output window, operand 0']
    %9 = vsyncpa [#allocation3], 0
    %s10 = scalar_lea.sflag [#allocation3], 1
    %11 = vsyncpa %s10, 0
    %12 = vsyncpa [#allocation6], 0
    %s13 = scalar_lea.sflag [#allocation6], 1
    %14 = vsyncpa %s13, 0
    %15 = vsyncpa [#allocation4], 0
    %s16 = scalar_lea.sflag [#allocation4], 1
    %17 = vsyncpa %s16, 0
    loop: start=0, step=1, limit=4
    $region2: #{tpu_custom_call.1} parent=1 // loop_pre_header
      _
    $region3: #{tpu_custom_call.1} parent=1 // loop_header
      %s19 = sphi 0, %s23
      %p20 = scmp.ge.s32.totalorder %s19, 4
      %s26 = sphi 0, %s38
      %s27 = sphi 0, %s34
      %s28 = sphi 0, %s26
      %s29 = sphi 0, %s27
      %s30 = sphi 0, %s28
      %s31 = sphi 0, %s29
      %s43 = sphi 0, %s45
      %s46 = sphi 0, %s43
      %s47 = sphi 0, %s46
      %s63 = sphi 0, %s47
      %s69 = sphi 0, %s71
      %s72 = sphi 0, %s69
      %s73 = sphi 0, %s72
      %s89 = sphi 0, %s73
      %s97 = sphi 0, %s99
      %s100 = sphi 0, %s97
      %s101 = sphi 0, %s100
      %s117 = sphi 0, %s101
      %s121 = sphi 0, %s121
      %s123 = sphi 0, %s121
      %s124 = sphi 0, %s123
      %s138 = sphi 0, %s124
      %s146 = sphi 0, %s148
      %s149 = sphi 0, %s146
      %s150 = sphi 0, %s149
      %s166 = sphi 0, %s150
    $region4: #{tpu_custom_call.1} parent=1 // loop_header_branch
      %22 = sbr.rel (%p20) target = $region8
    $region5: #{tpu_custom_call.1} parent=1 // loop_body
      %s24 = ssub.s32 %s19, 1
      %s25 = ssub.s32 %s19, 2
      %s32 = sadd.s32 1, %s27
      %p33 = scmp.ge.s32.totalorder %s32, 1
      %s34 = scalar_select %p33, 0, %s32
      %s35 = sadd.s32 1, %s26
      %s36 = scalar_select %p33, %s35, %s26
      %p37 = scmp.ge.s32.totalorder %s36, 2
      %s38 = scalar_select %p37, 0, %s36
      %s39 = ssub.s32 %s26, %s38
      %s40 = ssub.s32 %s27, %s34
      %s41 = sor.u32 %s39, %s40
      %p42 = scmp.eq.s32.totalorder %s41, 0
      %s44 = sadd.s32 %s43, 1
      %s45 = scalar_select %p42, %s43, %s44
      %p48 = pneg %p42
      %p49 = scmp.eq.s32.totalorder %s19, 1
      %p50 = por %p48, %p49
      %p51 = scmp.ne.s32.totalorder %s43, %s46
      %p52 = scmp.eq.s32.totalorder %s19, 0
      %p53 = por %p51, %p52
      %p54 = scmp.ne.s32.totalorder %s43, %s46
      %p55 = scmp.eq.s32.totalorder %s24, 1
      %p56 = por %p54, %p55
      %p57 = scmp.ne.s32.totalorder %s46, %s47
      %p58 = scmp.eq.s32.totalorder %s24, 0
      %p59 = por %p57, %p58
      %p60 = scmp.ne.s32.totalorder %s46, %s47
      %p61 = scmp.eq.s32.totalorder %s25, 1
      %p62 = por %p60, %p61
      %p64 = scmp.ne.s32.totalorder %s47, %s63
      %p65 = scmp.eq.s32.totalorder %s25, 0
      %p66 = por %p64, %p65
      %s67 = ssub.s32 %s26, %s38
      %p68 = scmp.eq.s32.totalorder %s67, 0
      %s70 = sadd.s32 %s69, 1
      %s71 = scalar_select %p68, %s69, %s70
      %p74 = pneg %p68
      %p75 = scmp.eq.s32.totalorder %s19, 1
      %p76 = por %p74, %p75
      %p77 = scmp.ne.s32.totalorder %s69, %s72
      %p78 = scmp.eq.s32.totalorder %s19, 0
      %p79 = por %p77, %p78
      %p80 = scmp.ne.s32.totalorder %s69, %s72
      %p81 = scmp.eq.s32.totalorder %s24, 1
      %p82 = por %p80, %p81
      %p83 = scmp.ne.s32.totalorder %s72, %s73
      %p84 = scmp.eq.s32.totalorder %s24, 0
      %p85 = por %p83, %p84
      %p86 = scmp.ne.s32.totalorder %s72, %s73
      %p87 = scmp.eq.s32.totalorder %s25, 1
      %p88 = por %p86, %p87
      %p90 = scmp.ne.s32.totalorder %s73, %s89
      %p91 = scmp.eq.s32.totalorder %s25, 0
      %p92 = por %p90, %p91
      %s93 = ssub.s32 %s26, %s38
      %s94 = ssub.s32 %s27, %s34
      %s95 = sor.u32 %s93, %s94
      %p96 = scmp.eq.s32.totalorder %s95, 0
      %s98 = sadd.s32 %s97, 1
      %s99 = scalar_select %p96, %s97, %s98
      %p102 = pneg %p96
      %p103 = scmp.eq.s32.totalorder %s19, 1
      %p104 = por %p102, %p103
      %p105 = scmp.ne.s32.totalorder %s97, %s100
      %p106 = scmp.eq.s32.totalorder %s19, 0
      %p107 = por %p105, %p106
      %p108 = scmp.ne.s32.totalorder %s97, %s100
      %p109 = scmp.eq.s32.totalorder %s24, 1
      %p110 = por %p108, %p109
      %p111 = scmp.ne.s32.totalorder %s100, %s101
      %p112 = scmp.eq.s32.totalorder %s24, 0
      %p113 = por %p111, %p112
      %p114 = scmp.ne.s32.totalorder %s100, %s101
      %p115 = scmp.eq.s32.totalorder %s25, 1
      %p116 = por %p114, %p115
      %p118 = scmp.ne.s32.totalorder %s101, %s117
      %p119 = scmp.eq.s32.totalorder %s25, 0
      %p120 = por %p118, %p119
      %s122 = sadd.s32 %s121, 1
      %p125 = scmp.eq.s32.totalorder %s19, 1
      %p126 = scmp.ne.s32.totalorder %s121, %s123
      %p127 = scmp.eq.s32.totalorder %s19, 0
      %p128 = por %p126, %p127
      %p129 = scmp.ne.s32.totalorder %s121, %s123
      %p130 = scmp.eq.s32.totalorder %s24, 1
      %p131 = por %p129, %p130
      %p132 = scmp.ne.s32.totalorder %s123, %s124
      %p133 = scmp.eq.s32.totalorder %s24, 0
      %p134 = por %p132, %p133
      %p135 = scmp.ne.s32.totalorder %s123, %s124
      %p136 = scmp.eq.s32.totalorder %s25, 1
      %p137 = por %p135, %p136
      %p139 = scmp.ne.s32.totalorder %s124, %s138
      %p140 = scmp.eq.s32.totalorder %s25, 0
      %p141 = por %p139, %p140
      %s142 = ssub.s32 %s26, %s38
      %s143 = ssub.s32 %s27, %s34
      %s144 = sor.u32 %s142, %s143
      %p145 = scmp.eq.s32.totalorder %s144, 0
      %s147 = sadd.s32 %s146, 1
      %s148 = scalar_select %p145, %s146, %s147
      %p151 = pneg %p145
      %p152 = scmp.eq.s32.totalorder %s19, 1
      %p153 = por %p151, %p152
      %p154 = scmp.ne.s32.totalorder %s146, %s149
      %p155 = scmp.eq.s32.totalorder %s19, 0
      %p156 = por %p154, %p155
      %p157 = scmp.ne.s32.totalorder %s146, %s149
      %p158 = scmp.eq.s32.totalorder %s24, 1
      %p159 = por %p157, %p158
      %p160 = scmp.ne.s32.totalorder %s149, %s150
      %p161 = scmp.eq.s32.totalorder %s24, 0
      %p162 = por %p160, %p161
      %p163 = scmp.ne.s32.totalorder %s149, %s150
      %p164 = scmp.eq.s32.totalorder %s25, 1
      %p165 = por %p163, %p164
      %p167 = scmp.ne.s32.totalorder %s150, %s166
      %p168 = scmp.eq.s32.totalorder %s25, 0
      %p169 = por %p167, %p168
      %p170 = scmp.le.s32.totalorder 1, %s19
      %p171 = scmp.lt.s32.totalorder %s19, 3
      %p172 = pnand %p170, %p171
      %p173 = pneg %p172
      // Predicated region
      $region9: #{tpu_custom_call.1} parent=5 // pred_check
        _
      $region10: #{tpu_custom_call.1} parent=5 // pred_check_branch
        %175 = sbr.rel (%p172) target = $region12
      $region11: #{tpu_custom_call.1} parent=5 // pred_region
        %s176 = ssub.s32 %s19, 1
        // Predicated region
        $region13: #{tpu_custom_call.1} parent=11 // pred_check
          %p177 = pneg %p134
        $region14: #{tpu_custom_call.1} parent=11 // pred_check_branch
          %179 = sbr.rel (%p177) target = $region16
        $region15: #{tpu_custom_call.1} parent=11 // pred_region
          _
        $region16: #{tpu_custom_call.1} parent=11 // pred_fallthru
          _
      $region12: #{tpu_custom_call.1} parent=5 // pred_fallthru
        _
      %p180 = scmp.lt.s32.totalorder %s19, 2
      // Predicated region
      $region17: #{tpu_custom_call.1} parent=5 // pred_check
        %p181 = pneg %p180
      $region18: #{tpu_custom_call.1} parent=5 // pred_check_branch
        %183 = sbr.rel (%p181) target = $region20
      $region19: #{tpu_custom_call.1} parent=5 // pred_region
        // Predicated region
        $region21: #{tpu_custom_call.1} parent=19 // pred_check
          %p184 = pneg %p53
        $region22: #{tpu_custom_call.1} parent=19 // pred_check_branch
          %186 = sbr.rel (%p184) target = $region24
        $region23: #{tpu_custom_call.1} parent=19 // pred_region
          %s187 = sand.u32 %s43, 1
          %s188 = scalar_lea.sflag [#allocation3], %s187
          %s189 = sand.u32 %s43, 1
          %s190 = smul.addr %s189, 8
          %s191 = scalar_lea.vmem [#allocation2], %s190
          %s193 = ssub.s32 128, 128
          %194 = vsyncadd %s188, %s193
          %s195 = sadd.s32 %s27, %s26
          %s196 = smul.addr %s195, 128
          %s197 = scalar_lea.hbm %s0, %s196
          %s199 = sshll.u32 %s191, 4
          %s200 = int_to_ptr.vmem [resolvable:$true] %s199
          %202 = dma.hbm_to_vmem [thread:$0]  %s197, 128, %s200, %s188
        $region24: #{tpu_custom_call.1} parent=19 // pred_fallthru
          _
        // Predicated region
        $region25: #{tpu_custom_call.1} parent=19 // pred_check
          %p203 = pneg %p79
        $region26: #{tpu_custom_call.1} parent=19 // pred_check_branch
          %205 = sbr.rel (%p203) target = $region28
        $region27: #{tpu_custom_call.1} parent=19 // pred_region
          %s206 = sand.u32 %s19, 1
          %s207 = scalar_lea.sflag [#allocation6], %s206
          %s208 = sand.u32 %s69, 1
          %s209 = smul.addr %s208, 8
          %s210 = scalar_lea.vmem [#allocation5], %s209
          %s212 = ssub.s32 128, 128
          %213 = vsyncadd %s207, %s212
          %s214 = smul.addr %s26, 128
          %s215 = scalar_lea.hbm %s1, %s214
          %s217 = sshll.u32 %s210, 4
          %s218 = int_to_ptr.vmem [resolvable:$true] %s217
          %220 = dma.hbm_to_vmem [thread:$0]  %s215, 128, %s218, %s207
        $region28: #{tpu_custom_call.1} parent=19 // pred_fallthru
          _
        // Predicated region
        $region29: #{tpu_custom_call.1} parent=19 // pred_check
          %p221 = pneg %p107
        $region30: #{tpu_custom_call.1} parent=19 // pred_check_branch
          %223 = sbr.rel (%p221) target = $region32
        $region31: #{tpu_custom_call.1} parent=19 // pred_region
          %s224 = sand.u32 %s19, 1
          %s225 = scalar_lea.sflag [#allocation6], %s224
          %s226 = sand.u32 %s97, 1
          %s227 = smul.addr %s226, 8
          %s228 = scalar_lea.vmem [#allocation7], %s227
          %s230 = ssub.s32 128, 128
          %231 = vsyncadd %s225, %s230
          %s232 = sadd.s32 %s27, %s26
          %s233 = smul.addr %s232, 128
          %s234 = scalar_lea.hbm %s2, %s233
          %s236 = sshll.u32 %s228, 4
          %s237 = int_to_ptr.vmem [resolvable:$true] %s236
          %239 = dma.hbm_to_vmem [thread:$0]  %s234, 128, %s237, %s225
        $region32: #{tpu_custom_call.1} parent=19 // pred_fallthru
          _
      $region20: #{tpu_custom_call.1} parent=5 // pred_fallthru
        _
      %p240 = scmp.le.s32.totalorder 1, %s19
      %p241 = scmp.lt.s32.totalorder %s19, 3
      %p242 = pnand %p240, %p241
      %p243 = pneg %p242
      // Predicated region
      $region33: #{tpu_custom_call.1} parent=5 // pred_check
        _
      $region34: #{tpu_custom_call.1} parent=5 // pred_check_branch
        %245 = sbr.rel (%p242) target = $region36
      $region35: #{tpu_custom_call.1} parent=5 // pred_region
        %s246 = ssub.s32 %s19, 1
        %s247 = sand.u32 %s46, 1
        %s248 = scalar_lea.sflag [#allocation3], %s247
        %s249 = sand.u32 %s46, 1
        %s250 = smul.addr %s249, 8
        %s251 = scalar_lea.vmem [#allocation2], %s250
        // Predicated region
        $region37: #{tpu_custom_call.1} parent=35 // pred_check
          %p252 = pneg %p59
        $region38: #{tpu_custom_call.1} parent=35 // pred_check_branch
          %254 = sbr.rel (%p252) target = $region40
        $region39: #{tpu_custom_call.1} parent=35 // pred_region
          %255 = dma.done %s248, 128
        $region40: #{tpu_custom_call.1} parent=35 // pred_fallthru
          _
        %s256 = sand.u32 %s24, 1
        %s257 = scalar_lea.sflag [#allocation6], %s256
        %s258 = sand.u32 %s72, 1
        %s259 = smul.addr %s258, 8
        %s260 = scalar_lea.vmem [#allocation5], %s259
        // Predicated region
        $region41: #{tpu_custom_call.1} parent=35 // pred_check
          %p261 = pneg %p85
        $region42: #{tpu_custom_call.1} parent=35 // pred_check_branch
          %263 = sbr.rel (%p261) target = $region44
        $region43: #{tpu_custom_call.1} parent=35 // pred_region
          %264 = dma.done %s257, 128
        $region44: #{tpu_custom_call.1} parent=35 // pred_fallthru
          _
        %s265 = sand.u32 %s24, 1
        %s266 = scalar_lea.sflag [#allocation6], %s265
        %s267 = sand.u32 %s100, 1
        %s268 = smul.addr %s267, 8
        %s269 = scalar_lea.vmem [#allocation7], %s268
        // Predicated region
        $region45: #{tpu_custom_call.1} parent=35 // pred_check
          %p270 = pneg %p113
        $region46: #{tpu_custom_call.1} parent=35 // pred_check_branch
          %272 = sbr.rel (%p270) target = $region48
        $region47: #{tpu_custom_call.1} parent=35 // pred_region
          %273 = dma.done %s266, 128
        $region48: #{tpu_custom_call.1} parent=35 // pred_fallthru
          _
        %s274 = sand.u32 %s46, 1
        %s275 = scalar_lea.sflag [#allocation3], %s274
        %s276 = sand.u32 %s46, 1
        %s277 = smul.addr %s276, 8
        %s278 = scalar_lea.vmem [#allocation2], %s277
        %p279 = pneg %p59
        %p280 = pneg %p56
        %s281 = sand.u32 %s24, 1
        %s282 = scalar_lea.sflag [#allocation6], %s281
        %s283 = sand.u32 %s72, 1
        %s284 = smul.addr %s283, 8
        %s285 = scalar_lea.vmem [#allocation5], %s284
        %p286 = pneg %p85
        %p287 = pneg %p82
        %s288 = sand.u32 %s24, 1
        %s289 = scalar_lea.sflag [#allocation6], %s288
        %s290 = sand.u32 %s100, 1
        %s291 = smul.addr %s290, 8
        %s292 = scalar_lea.vmem [#allocation7], %s291
        %p293 = pneg %p113
        %p294 = pneg %p110
        %p295 = pneg %p134
        %p296 = pneg %p131
        %p297 = pneg %p162
        %p298 = pneg %p159
        %s299 = sand.u32 %s149, 1
        %s300 = scalar_lea.sflag [#allocation4], %s299
        %s301 = sand.u32 %s149, 1
        %s302 = smul.addr %s301, 8
        %s303 = scalar_lea.vmem [#allocation8], %s302
        %v305 = vld [vmem:[%s251] sm:$0xff]
        %v306 = vld [vmem:[%s260] sm:$0xff]
        %v307 = vld [vmem:[%s269] sm:$0xff]
        %v308 = vld [vmem:[%s3] sm:$0xf]
        %v309 = vand.u32 2147483647, %v305
        %311 = vrot.lane.b32.xlu0 %v309, 32
        %v312 = vpop.permute.xlu0 %311
        %vm314 = vcmask 261120
        %v315 = vsel %vm314, %v305, %v312
        %v316 = vand.u32 2147483647, %v306
        %318 = vrot.lane.b32.xlu0 %v316, 32
        %v319 = vpop.permute.xlu0 %318
        %v321 = vsel %vm314, %v306, %v319
        %v322 = vmul.f32 %v308, 0.6
        %v323 = vmul.f32 %v308, 0.4
        %325 = vrot.lane.b32.xlu0 %v323, 32
        %v326 = vpop.permute.xlu0 %325
        %v328 = vsel %vm314, %v322, %v326
        %v329 = vpack.c.bf16 %v321, %v321
        %v330 = vlaneseq
        %v331 = vshrl.u32 %v330, 7
        %v332 = vsub.s32 0, %v331
        %v333 = vrot.slane %v328, %v332
        %v334 = vmul.f32 %v315, %v333
        %v335 = vpack.c.bf16 %v334, %v334
        %vm336 = vcmask 523264
        %v338 = vsel %vm336, %v335, 0
        %v341 = vsel %vm336, %v329, 0
        %343 = vmatprep.subr.bf16.mxu0 0
        %344 = vmatpush1.bf16.xpose.msra.mxu0 0
        %345 = vmatprep.subr.bf16.mxu0 0
        %346 = vmatpush1.bf16.xpose.msra.mxu0 0
        %347 = vmatprep.subr.bf16.mxu0 0
        %348 = vmatpush1.bf16.xpose.msra.mxu0 0
        %349 = vmatprep.subr.bf16.mxu0 0
        %350 = vmatpush1.bf16.xpose.msra.mxu0 0
        %351 = vmatprep.subr.bf16.mxu0 0
        %352 = vmatpush1.bf16.xpose.msra.mxu0 0
        %353 = vmatprep.subr.bf16.mxu0 0
        %354 = vmatpush1.bf16.xpose.msra.mxu0 0
        %355 = vmatprep.subr.bf16.mxu0 0
        %356 = vmatpush1.bf16.xpose.msra.mxu0 0
        %357 = vmatprep.subr.bf16.mxu0 0
        %358 = vmatpush1.bf16.xpose.msra.mxu0 %v341
        %359 = vmatprep.subr.bf16.mxu0 0
        %360 = vmatpush2.bf16.xpose.msra.mxu0 0
        %361 = vmatprep.subr.bf16.mxu0 0
        %362 = vmatpush2.bf16.xpose.msra.mxu0 0
        %363 = vmatprep.subr.bf16.mxu0 0
        %364 = vmatpush2.bf16.xpose.msra.mxu0 0
        %365 = vmatprep.subr.bf16.mxu0 0
        %366 = vmatpush2.bf16.xpose.msra.mxu0 0
        %367 = vmatprep.subr.bf16.mxu0 0
        %368 = vmatpush2.bf16.xpose.msra.mxu0 0
        %369 = vmatprep.subr.bf16.mxu0 0
        %370 = vmatpush2.bf16.xpose.msra.mxu0 0
        %371 = vmatprep.subr.bf16.mxu0 0
        %372 = vmatpush2.bf16.xpose.msra.mxu0 0
        %373 = vmatprep.subr.bf16.mxu0 0
        %374 = vmatpush2.bf16.xpose.msra.mxu0 0
        %375 = vmatprep.mubr.bf16.mxu0 0
        %376 = vmatmul.mubr.bf16.gmra.mxu0 %v338
        %v377 = vpop.f32.mrf.mxu0
        %v378 = vadd.f32 0.0, %v377
        %v379 = vpop.f32.mrf.mxu0
        %v380 = vpop.f32.mrf.mxu0
        %v381 = vpop.f32.mrf.mxu0
        %382 = vdwg.mxu0
        %v383 = vlaneseq
        %v384 = vshrl.u32 %v383, 7
        %v385 = vsub.s32 1, %v384
        %v386 = vrot.slane %v328, %v385
        %v387 = vmul.f32 %v315, %v386
        %v388 = vpack.c.bf16 %v387, %v387
        %v390 = vsel %vm336, %v388, 0
        %392 = vmatprep.subr.bf16.mxu0 0
        %393 = vmatpush1.bf16.xpose.msra.mxu0 0
        %394 = vmatprep.subr.bf16.mxu0 0
        %395 = vmatpush1.bf16.xpose.msra.mxu0 0
        %396 = vmatprep.subr.bf16.mxu0 0
        %397 = vmatpush1.bf16.xpose.msra.mxu0 0
        %398 = vmatprep.subr.bf16.mxu0 0
        %399 = vmatpush1.bf16.xpose.msra.mxu0 0
        %400 = vmatprep.subr.bf16.mxu0 0
        %401 = vmatpush1.bf16.xpose.msra.mxu0 0
        %402 = vmatprep.subr.bf16.mxu0 0
        %403 = vmatpush1.bf16.xpose.msra.mxu0 0
        %404 = vmatprep.subr.bf16.mxu0 0
        %405 = vmatpush1.bf16.xpose.msra.mxu0 0
        %406 = vmatprep.subr.bf16.mxu0 0
        %407 = vmatpush1.bf16.xpose.msra.mxu0 %v341
        %408 = vmatprep.subr.bf16.mxu0 0
        %409 = vmatpush2.bf16.xpose.msra.mxu0 0
        %410 = vmatprep.subr.bf16.mxu0 0
        %411 = vmatpush2.bf16.xpose.msra.mxu0 0
        %412 = vmatprep.subr.bf16.mxu0 0
        %413 = vmatpush2.bf16.xpose.msra.mxu0 0
        %414 = vmatprep.subr.bf16.mxu0 0
        %415 = vmatpush2.bf16.xpose.msra.mxu0 0
        %416 = vmatprep.subr.bf16.mxu0 0
        %417 = vmatpush2.bf16.xpose.msra.mxu0 0
        %418 = vmatprep.subr.bf16.mxu0 0
        %419 = vmatpush2.bf16.xpose.msra.mxu0 0
        %420 = vmatprep.subr.bf16.mxu0 0
        %421 = vmatpush2.bf16.xpose.msra.mxu0 0
        %422 = vmatprep.subr.bf16.mxu0 0
        %423 = vmatpush2.bf16.xpose.msra.mxu0 0
        %424 = vmatprep.mubr.bf16.mxu0 0
        %425 = vmatmul.mubr.bf16.gmra.mxu0 %v390
        %v426 = vpop.f32.mrf.mxu0
        %v427 = vadd.f32 0.0, %v426
        %v428 = vpop.f32.mrf.mxu0
        %v429 = vpop.f32.mrf.mxu0
        %v430 = vpop.f32.mrf.mxu0
        %431 = vdwg.mxu0
        %v432 = vlaneseq
        %v433 = vshrl.u32 %v432, 7
        %v434 = vsub.s32 2, %v433
        %v435 = vrot.slane %v328, %v434
        %v436 = vmul.f32 %v315, %v435
        %v437 = vpack.c.bf16 %v436, %v436
        %v439 = vsel %vm336, %v437, 0
        %441 = vmatprep.subr.bf16.mxu0 0
        %442 = vmatpush1.bf16.xpose.msra.mxu0 0
        %443 = vmatprep.subr.bf16.mxu0 0
        %444 = vmatpush1.bf16.xpose.msra.mxu0 0
        %445 = vmatprep.subr.bf16.mxu0 0
        %446 = vmatpush1.bf16.xpose.msra.mxu0 0
        %447 = vmatprep.subr.bf16.mxu0 0
        %448 = vmatpush1.bf16.xpose.msra.mxu0 0
        %449 = vmatprep.subr.bf16.mxu0 0
        %450 = vmatpush1.bf16.xpose.msra.mxu0 0
        %451 = vmatprep.subr.bf16.mxu0 0
        %452 = vmatpush1.bf16.xpose.msra.mxu0 0
        %453 = vmatprep.subr.bf16.mxu0 0
        %454 = vmatpush1.bf16.xpose.msra.mxu0 0
        %455 = vmatprep.subr.bf16.mxu0 0
        %456 = vmatpush1.bf16.xpose.msra.mxu0 %v341
        %457 = vmatprep.subr.bf16.mxu0 0
        %458 = vmatpush2.bf16.xpose.msra.mxu0 0
        %459 = vmatprep.subr.bf16.mxu0 0
        %460 = vmatpush2.bf16.xpose.msra.mxu0 0
        %461 = vmatprep.subr.bf16.mxu0 0
        %462 = vmatpush2.bf16.xpose.msra.mxu0 0
        %463 = vmatprep.subr.bf16.mxu0 0
        %464 = vmatpush2.bf16.xpose.msra.mxu0 0
        %465 = vmatprep.subr.bf16.mxu0 0
        %466 = vmatpush2.bf16.xpose.msra.mxu0 0
        %467 = vmatprep.subr.bf16.mxu0 0
        %468 = vmatpush2.bf16.xpose.msra.mxu0 0
        %469 = vmatprep.subr.bf16.mxu0 0
        %470 = vmatpush2.bf16.xpose.msra.mxu0 0
        %471 = vmatprep.subr.bf16.mxu0 0
        %472 = vmatpush2.bf16.xpose.msra.mxu0 0
        %473 = vmatprep.mubr.bf16.mxu0 0
        %474 = vmatmul.mubr.bf16.gmra.mxu0 %v439
        %v475 = vpop.f32.mrf.mxu0
        %v476 = vadd.f32 0.0, %v475
        %v477 = vpop.f32.mrf.mxu0
        %v478 = vpop.f32.mrf.mxu0
        %v479 = vpop.f32.mrf.mxu0
        %480 = vdwg.mxu0
        %v481 = vlaneseq
        %v482 = vshrl.u32 %v481, 7
        %v483 = vsub.s32 3, %v482
        %v484 = vrot.slane %v328, %v483
        %v485 = vmul.f32 %v315, %v484
        %v486 = vpack.c.bf16 %v485, %v485
        %v488 = vsel %vm336, %v486, 0
        %490 = vmatprep.subr.bf16.mxu0 0
        %491 = vmatpush1.bf16.xpose.msra.mxu0 0
        %492 = vmatprep.subr.bf16.mxu0 0
        %493 = vmatpush1.bf16.xpose.msra.mxu0 0
        %494 = vmatprep.subr.bf16.mxu0 0
        %495 = vmatpush1.bf16.xpose.msra.mxu0 0
        %496 = vmatprep.subr.bf16.mxu0 0
        %497 = vmatpush1.bf16.xpose.msra.mxu0 0
        %498 = vmatprep.subr.bf16.mxu0 0
        %499 = vmatpush1.bf16.xpose.msra.mxu0 0
        %500 = vmatprep.subr.bf16.mxu0 0
        %501 = vmatpush1.bf16.xpose.msra.mxu0 0
        %502 = vmatprep.subr.bf16.mxu0 0
        %503 = vmatpush1.bf16.xpose.msra.mxu0 0
        %504 = vmatprep.subr.bf16.mxu0 0
        %505 = vmatpush1.bf16.xpose.msra.mxu0 %v341
        %506 = vmatprep.subr.bf16.mxu0 0
        %507 = vmatpush2.bf16.xpose.msra.mxu0 0
        %508 = vmatprep.subr.bf16.mxu0 0
        %509 = vmatpush2.bf16.xpose.msra.mxu0 0
        %510 = vmatprep.subr.bf16.mxu0 0
        %511 = vmatpush2.bf16.xpose.msra.mxu0 0
        %512 = vmatprep.subr.bf16.mxu0 0
        %513 = vmatpush2.bf16.xpose.msra.mxu0 0
        %514 = vmatprep.subr.bf16.mxu0 0
        %515 = vmatpush2.bf16.xpose.msra.mxu0 0
        %516 = vmatprep.subr.bf16.mxu0 0
        %517 = vmatpush2.bf16.xpose.msra.mxu0 0
        %518 = vmatprep.subr.bf16.mxu0 0
        %519 = vmatpush2.bf16.xpose.msra.mxu0 0
        %520 = vmatprep.subr.bf16.mxu0 0
        %521 = vmatpush2.bf16.xpose.msra.mxu0 0
        %522 = vmatprep.mubr.bf16.mxu0 0
        %523 = vmatmul.mubr.bf16.gmra.mxu0 %v488
        %v524 = vpop.f32.mrf.mxu0
        %v525 = vadd.f32 0.0, %v524
        %v526 = vpop.f32.mrf.mxu0
        %v527 = vpop.f32.mrf.mxu0
        %v528 = vpop.f32.mrf.mxu0
        %529 = vdwg.mxu0
        %vm530 = vcmp.eq.s32.totalorder %v307, 1
        %v531 = vsel %vm530, %v378, -9e+15
        %vm532 = vcmp.eq.s32.totalorder %v307, 2
        %v533 = vsel %vm532, %v427, %v531
        %vm534 = vcmp.eq.s32.totalorder %v307, 3
        %v535 = vsel %vm534, %v476, %v533
        %vm536 = vcmp.eq.s32.totalorder %v307, 4
        %v537 = vsel %vm536, %v525, %v535
        %vm538 = vcmask 64512
        %v539 = vsel %vm538, %v537, -inf
        %540 = vmax.xlane.f32.xlu0 %v539
        %v541 = vpop.xlane.xlu0 %540
        %v542 = vsub.f32 %v537, %v541
        %v543 = vmul.f32 %v542, 1.442695
        %v544 = vpow.pop %v543
        %v545 = vsel %vm538, %v544, 0.0
        %546 = vadd.xlane.f32.xlu0 %v545
        %v547 = vpop.xlane.xlu0 %546
        %v548 = vpack.c.bf16 %v544, %v544
        %v549 = vpack.c.bf16 %v306, %v306
        %v551 = vsel %vm538, %v548, 0
        %vm553 = vcmask 1043456
        %v555 = vsel %vm553, %v549, 0
        %557 = vmatprep.subr.bf16.mxu0 0
        %558 = vmatpush1.bf16.msra.mxu0 0
        %559 = vmatprep.subr.bf16.mxu0 0
        %560 = vmatpush1.bf16.msra.mxu0 0
        %561 = vmatprep.subr.bf16.mxu0 0
        %562 = vmatpush1.bf16.msra.mxu0 0
        %563 = vmatprep.subr.bf16.mxu0 0
        %564 = vmatpush1.bf16.msra.mxu0 0
        %565 = vmatprep.subr.bf16.mxu0 0
        %566 = vmatpush1.bf16.msra.mxu0 0
        %567 = vmatprep.subr.bf16.mxu0 0
        %568 = vmatpush1.bf16.msra.mxu0 0
        %569 = vmatprep.subr.bf16.mxu0 0
        %570 = vmatpush1.bf16.msra.mxu0 0
        %571 = vmatprep.subr.bf16.mxu0 0
        %572 = vmatpush1.bf16.msra.mxu0 %v555
        %573 = vmatprep.subr.bf16.mxu0 0
        %574 = vmatpush2.bf16.msra.mxu0 0
        %575 = vmatprep.subr.bf16.mxu0 0
        %576 = vmatpush2.bf16.msra.mxu0 0
        %577 = vmatprep.subr.bf16.mxu0 0
        %578 = vmatpush2.bf16.msra.mxu0 0
        %579 = vmatprep.subr.bf16.mxu0 0
        %580 = vmatpush2.bf16.msra.mxu0 0
        %581 = vmatprep.subr.bf16.mxu0 0
        %582 = vmatpush2.bf16.msra.mxu0 0
        %583 = vmatprep.subr.bf16.mxu0 0
        %584 = vmatpush2.bf16.msra.mxu0 0
        %585 = vmatprep.subr.bf16.mxu0 0
        %586 = vmatpush2.bf16.msra.mxu0 0
        %587 = vmatprep.subr.bf16.mxu0 0
        %588 = vmatpush2.bf16.msra.mxu0 0
        %589 = vmatprep.mubr.bf16.mxu0 0
        %590 = vmatmul.mubr.bf16.gmra.mxu0 %v551
        %v591 = vpop.f32.mrf.mxu0
        %v592 = vadd.f32 0.0, %v591
        %v593 = vpop.f32.mrf.mxu0
        %v594 = vpop.f32.mrf.mxu0
        %v595 = vpop.f32.mrf.mxu0
        %596 = vdwg.mxu0
        %v597 = vrcp.pop %v547
        %v598 = vmul.f32 %v592, %v597
        %599 = vst.msk [vmem:[%s303] sm:$0xff] %vm314, %v598
        %s600 = sand.u32 %s149, 1
        %s601 = scalar_lea.sflag [#allocation4], %s600
        %s602 = sand.u32 %s149, 1
        %s603 = smul.addr %s602, 8
        %s604 = scalar_lea.vmem [#allocation8], %s603
        // Predicated region
        $region49: #{tpu_custom_call.1} parent=35 // pred_check
          %p605 = pneg %p159
        $region50: #{tpu_custom_call.1} parent=35 // pred_check_branch
          %607 = sbr.rel (%p605) target = $region52
        $region51: #{tpu_custom_call.1} parent=35 // pred_region
          %s609 = ssub.s32 128, 128
          %610 = vsyncadd %s601, %s609
          %s611 = sadd.s32 %s29, %s28
          %s612 = smul.addr %s611, 128
          %s613 = scalar_lea.hbm %s4, %s612
          %s615 = sshll.u32 %s604, 4
          %s616 = int_to_ptr.vmem [resolvable:$true] %s615
          %618 = dma.vmem_to_hbm [thread:$0]  %s616, 128, %s613, %s601
        $region52: #{tpu_custom_call.1} parent=35 // pred_fallthru
          _
      $region36: #{tpu_custom_call.1} parent=5 // pred_fallthru
        _
      %p619 = scmp.le.s32.totalorder 2, %s19
      // Predicated region
      $region53: #{tpu_custom_call.1} parent=5 // pred_check
        %p620 = pneg %p619
      $region54: #{tpu_custom_call.1} parent=5 // pred_check_branch
        %622 = sbr.rel (%p620) target = $region56
      $region55: #{tpu_custom_call.1} parent=5 // pred_region
        %s623 = ssub.s32 %s19, 2
        // Predicated region
        $region57: #{tpu_custom_call.1} parent=55 // pred_check
          %p624 = pneg %p165
        $region58: #{tpu_custom_call.1} parent=55 // pred_check_branch
          %626 = sbr.rel (%p624) target = $region60
        $region59: #{tpu_custom_call.1} parent=55 // pred_region
          %s627 = sand.u32 %s150, 1
          %s628 = scalar_lea.sflag [#allocation4], %s627
          %s629 = sand.u32 %s150, 1
          %s630 = smul.addr %s629, 8
          %s631 = scalar_lea.vmem [#allocation8], %s630
          %632 = dma.done %s628, 128
        $region60: #{tpu_custom_call.1} parent=55 // pred_fallthru
          _
      $region56: #{tpu_custom_call.1} parent=5 // pred_fallthru
        _
    $region6: #{tpu_custom_call.1} parent=1 // loop_footer
      %s23 = sadd.s32 1, %s19
    $region7: #{tpu_custom_call.1} parent=1 // loop_footer_branch
      %18 = sbr.rel target = $region3
    $region8: #{tpu_custom_call.1} parent=1 // loop_exit
      _
    %633 = vsyncpa [#allocation3], 1
    %s634 = scalar_lea.sflag [#allocation3], 1
    %635 = vsyncpa %s634, 1
    %636 = vsyncpa [#allocation6], 1
    %s637 = scalar_lea.sflag [#allocation6], 1
    %638 = vsyncpa %s637, 1
    %639 = vsyncpa [#allocation4], 1
    %s640 = scalar_lea.sflag [#allocation4], 1
    %641 = vsyncpa %s640, 1

</llo_original>
